<compile_context>
chip_gen: v5e
topology: v5e:2x2
jax: 0.10.0
libtpu: 0.0.40
codegen_flags: <defaults>
</compile_context>

<pallas_src>
import jax
import jax.numpy as jnp
from jax import lax
from jax.experimental import pallas as pl
from jax.experimental.pallas import tpu as pltpu

_EPS_SQ = 1e-24  # F.normalize clamps ||x|| at eps=1e-12  ->  ||x||^2 at 1e-24


def _round_up(x: int, m: int) -> int:
    return (x + m - 1) // m * m


# ---------------------------------------------------------------------------
# Prologue 1: normalize q & k rows, fold 1/temperature into q, compute l_pos.
# ---------------------------------------------------------------------------
def _make_prep_qk_kernel(inv_temp: float):
    def kernel(q_ref, k_ref, qs_ref, lpos_ref):
        q = q_ref[...].astype(jnp.float32)            # (TN, D)
        kk = k_ref[...].astype(jnp.float32)           # (TN, D)
        q_inv = lax.rsqrt(jnp.maximum(
            jnp.sum(q * q, axis=1, keepdims=True), _EPS_SQ))
        k_inv = lax.rsqrt(jnp.maximum(
            jnp.sum(kk * kk, axis=1, keepdims=True), _EPS_SQ))
        q_scaled = q * (q_inv * inv_temp)             # normalized q with 1/T folded in
        lpos_ref[...] = jnp.sum(q_scaled * (kk * k_inv), axis=1, keepdims=True)
        qs_ref[...] = q_scaled.astype(qs_ref.dtype)
    return kernel


# ---------------------------------------------------------------------------
# Prologue 2: normalize queue rows once (hoisted out of the (i, j) hot loop).
# ---------------------------------------------------------------------------
def _normalize_rows_kernel(x_ref, o_ref):
    x = x_ref[...].astype(jnp.float32)                # (TK, D)
    inv = lax.rsqrt(jnp.maximum(
        jnp.sum(x * x, axis=1, keepdims=True), _EPS_SQ))
    o_ref[...] = (x * inv).astype(o_ref.dtype)


# ---------------------------------------------------------------------------
# Main streaming kernel: logits -> static-shift logsumexp -> per-row loss.
# ---------------------------------------------------------------------------
def _make_loss_kernel(m_shift: float, k_actual: int, tk: int, need_mask: bool):
    def kernel(lpos_ref, qs_ref, queue_ref, out_ref):
        j = pl.program_id(1)
        last = pl.num_programs(1) - 1

        # Seed the resident output accumulator with the positive term.
        @pl.when(j == 0)
        def _init():
            out_ref[...] = jnp.exp(lpos_ref[...] - m_shift)

        # (TN, TK) logits tile: contract the D dims directly (no transpose);
        # 1/T is already folded into qs; f32 accumulation on the MXU.
        l_neg = lax.dot_general(
            qs_ref[...], queue_ref[...],
            dimension_numbers=(((1,), (1,)), ((), ())),
            preferred_element_type=jnp.float32)

        # Cosine similarities are <= 1, so logits <= 1/T == m_shift:
        # exp(l - m) <= 1 and the running sum stays <= K + 1. No online max.
        p = jnp.exp(l_neg - m_shift)

        if need_mask:
            # Only the last K tile has padded columns; keep the mask out of the
            # hot loop and build it as a cheap (1, TK) row vector.
            @pl.when(j == last)
            def _accum_masked():
                col = j * tk + lax.broadcasted_iota(jnp.int32, (1, tk), 1)
                valid = (col < k_actual).astype(jnp.float32)
                out_ref[...] += jnp.sum(p * valid, axis=1, keepdims=True)

            @pl.when(j != last)
            def _accum():
                out_ref[...] += jnp.sum(p, axis=1, keepdims=True)
        else:
            out_ref[...] += jnp.sum(p, axis=1, keepdims=True)

        # Finalize: per-row loss = logsumexp(logits) - l_pos.
        @pl.when(j == last)
        def _finalize():
            out_ref[...] = (m_shift + jnp.log(out_ref[...])) - lpos_ref[...]

    return kernel


def moco_ntxent_loss(q, k, queue, temperature: float = 0.07, *,
                     block_n: int = 256, block_k: int = 2048,
                     vmem_budget_bytes: int = 32 * 1024 * 1024):
    """q: (N, D), k: (N, D), queue: (K, D). Returns scalar f32 loss."""
    N, D = q.shape
    K, D2 = queue.shape
    assert D == D2 and k.shape == (N, D)

    mm_dtype = q.dtype                        # bf16 inputs feed the MXU as bf16
    itemsize = jnp.dtype(mm_dtype).itemsize
    sub = 8 if itemsize >= 4 else (16 if itemsize == 2 else 32)  # sublane packing

    # ---- N tiling: big tiles, but keep >= 2 "parallel" blocks (v7x megacore). ----
    if N >= 2 * block_n:
        tn = _round_up(block_n, sub)
    elif N >= 2 * 128:
        tn = _round_up(min(block_n, 128), sub)
    elif N >= 2 * sub:
        tn = _round_up(-(-N // 2), sub)       # two blocks whenever possible
    else:
        tn = _round_up(max(N, 1), sub)
    n_pad = _round_up(N, tn)

    # ---- K tiling sized against a scoped-VMEM budget. ----
    # footprint ~ 2*tk*D (queue dbl-buf) + 2*tn*D (qs) + lane-padded (tn,1) bufs
    #           + ~3*tn*tk*4 B of (TN, TK) f32 intermediates.
    fixed = 2 * tn * D * itemsize + 4 * tn * 128 * 4
    per_tk = 2 * D * itemsize + 3 * tn * 4
    tk_cap = max(sub, (max(vmem_budget_bytes - fixed, per_tk * sub) // per_tk)
                 // sub * sub)
    tk = min(block_k, tk_cap)
    if K <= tk:
        tk = _round_up(K, sub)
    else:
        tk = max(sub, (tk // sub) * sub)
    k_pad = _round_up(K, tk)
    need_mask = (k_pad != K)

    # Explicit VMEM limit (scoped defaults: 16 MiB v5e, 32 MiB v6e/v7x).
    vmem_limit = min(max(3 * vmem_budget_bytes // 2, 48 * 1024 * 1024),
                     96 * 1024 * 1024)

    # Zero-padded rows normalize to exact zeros and are masked / sliced off.
    qp = jnp.pad(q, ((0, n_pad - N), (0, 0))) if n_pad != N else q
    kp = jnp.pad(k, ((0, n_pad - N), (0, 0))) if n_pad != N else k
    queuep = jnp.pad(queue, ((0, k_pad - K), (0, 0))) if k_pad != K else queue

    inv_temp = 1.0 / float(temperature)

    # ---- Prologue 1: q/k normalization + l_pos (one O(N*D) pass). ----
    qs, l_pos = pl.pallas_call(
        _make_prep_qk_kernel(inv_temp),
        out_shape=[jax.ShapeDtypeStruct((n_pad, D), mm_dtype),
                   jax.ShapeDtypeStruct((n_pad, 1), jnp.float32)],
        grid=(n_pad // tn,),
        in_specs=[pl.BlockSpec((tn, D), lambda i: (i, 0)),
                  pl.BlockSpec((tn, D), lambda i: (i, 0))],
        out_specs=[pl.BlockSpec((tn, D), lambda i: (i, 0)),
                   pl.BlockSpec((tn, 1), lambda i: (i, 0))],
        compiler_params=pltpu.CompilerParams(
            dimension_semantics=("parallel",), vmem_limit_bytes=vmem_limit),
    )(qp, kp)

    # ---- Prologue 2: queue normalization, once (not once per (i, j) step). ----
    queue_n = pl.pallas_call(
        _normalize_rows_kernel,
        out_shape=jax.ShapeDtypeStruct((k_pad, D), mm_dtype),
        grid=(k_pad // tk,),
        in_specs=[pl.BlockSpec((tk, D), lambda i: (i, 0))],
        out_specs=pl.BlockSpec((tk, D), lambda i: (i, 0)),
        compiler_params=pltpu.CompilerParams(
            dimension_semantics=("parallel",), vmem_limit_bytes=vmem_limit),
    )(queuep)

    # ---- Main streaming kernel. ----
    m_shift = inv_temp                        # static lse shift: |cos| <= 1 -> logit <= 1/T
    kernel = _make_loss_kernel(m_shift, K, tk, need_mask)
    n_tiles, k_tiles = n_pad // tn, k_pad // tk

    cost = pl.CostEstimate(
        flops=2 * n_pad * k_pad * D + 2 * n_pad * k_pad,
        transcendentals=n_pad * k_pad + 2 * n_pad,
        bytes_accessed=(n_tiles * k_pad * D * itemsize          # queue re-streamed per N tile
                        + n_pad * D * itemsize + 12 * n_pad))

    per_row = pl.pallas_call(
        kernel,
        out_shape=jax.ShapeDtypeStruct((n_pad, 1), jnp.float32),
        grid_spec=pltpu.PrefetchScalarGridSpec(
            num_scalar_prefetch=0,
            grid=(n_tiles, k_tiles),
            in_specs=[
                pl.BlockSpec((tn, 1), lambda i, j: (i, 0)),    # l_pos (resident over j)
                pl.BlockSpec((tn, D), lambda i, j: (i, 0)),    # q_scaled (resident over j)
                pl.BlockSpec((tk, D), lambda i, j: (j, 0)),    # streamed queue tile
            ],
            out_specs=pl.BlockSpec((tn, 1), lambda i, j: (i, 0)),
        ),
        compiler_params=pltpu.CompilerParams(
            dimension_semantics=("parallel", "arbitrary"),
            vmem_limit_bytes=vmem_limit),
        cost_estimate=cost,
    )(l_pos, qs, queue_n)

    return jnp.mean(per_row[:N, 0])


def _reference_loss(q, k, queue, temperature=0.07):
    # Pure-JAX reference matching the PyTorch module.
    eps = 1e-12
    qn = q / jnp.maximum(jnp.linalg.norm(q, axis=1, keepdims=True), eps)
    kn = k / jnp.maximum(jnp.linalg.norm(k, axis=1, keepdims=True), eps)
    un = queue / jnp.maximum(jnp.linalg.norm(queue, axis=1, keepdims=True), eps)
    l_pos = jnp.sum(qn * kn, axis=1, keepdims=True)
    l_neg = qn @ un.T
    logits = jnp.concatenate([l_pos, l_neg], axis=1) / temperature
    lse = jax.scipy.special.logsumexp(logits, axis=1)
    return jnp.mean(lse - logits[:, 0])


if __name__ == "__main__":
    key = jax.random.PRNGKey(0)
    kq, kk_, kqueue = jax.random.split(key, 3)

    N, D, K = 8, 32, 16  # small shapes: batch=8, feature dim=32, queue size=16
    q = jax.random.normal(kq, (N, D), dtype=jnp.float32)
    k = jax.random.normal(kk_, (N, D), dtype=jnp.float32)
    queue = jax.random.normal(kqueue, (K, D), dtype=jnp.float32)

    loss = moco_ntxent_loss(q, k, queue, temperature=0.07)
    loss = jax.block_until_ready(loss)

    ref = _reference_loss(q, k, queue, temperature=0.07)
    assert jnp.allclose(loss, ref, rtol=1e-4, atol=1e-5), (loss, ref)

    print("KERNEL_OK")
</pallas_src>

<mosaic_0001>
module attributes {stable_mosaic.version = 11 : i64} {
  func.func @kernel(%arg0: i32, %arg1: memref<8x32xf32, #tpu.memory_space<vmem>>, %arg2: memref<8x32xf32, #tpu.memory_space<vmem>>, %arg3: memref<8x32xf32, #tpu.memory_space<vmem>>, %arg4: memref<8x1xf32, #tpu.memory_space<vmem>>) attributes {dimension_semantics = [#tpu.dimension_semantics<parallel>], iteration_bounds = array<i64: 1>, scalar_prefetch = 0 : i64, scratch_operands = 0 : i64, tpu.core_type = #tpu.core_type<tc>, window_params = [{transform_indices = @transform_0, window_bounds = array<i64: 8, 32>}, {transform_indices = @transform_1, window_bounds = array<i64: 8, 32>}, {transform_indices = @transform_2, window_bounds = array<i64: 8, 32>}, {transform_indices = @transform_3, window_bounds = array<i64: 8, 1>}]} {
    %c0 = arith.constant 0 : index
    %c0_0 = arith.constant 0 : index
    %0 = vector.load %arg1[%c0, %c0_0] : memref<8x32xf32, #tpu.memory_space<vmem>>, vector<8x32xf32>
    %c0_1 = arith.constant 0 : index
    %c0_2 = arith.constant 0 : index
    %1 = vector.load %arg2[%c0_1, %c0_2] : memref<8x32xf32, #tpu.memory_space<vmem>>, vector<8x32xf32>
    %2 = arith.mulf %0, %0 : vector<8x32xf32>
    %cst = arith.constant dense<0.000000e+00> : vector<8xf32>
    %3 = vector.multi_reduction <add>, %2, %cst [1] : vector<8x32xf32> to vector<8xf32>
    %4 = vector.shape_cast %3 : vector<8xf32> to vector<8x1xf32>
    %cst_3 = arith.constant 1.000000e-24 : f32
    %5 = vector.broadcast %cst_3 : f32 to vector<8x1xf32>
    %6 = arith.maximumf %4, %5 : vector<8x1xf32>
    %7 = math.rsqrt %6 : vector<8x1xf32>
    %8 = arith.mulf %1, %1 : vector<8x32xf32>
    %cst_4 = arith.constant dense<0.000000e+00> : vector<8xf32>
    %9 = vector.multi_reduction <add>, %8, %cst_4 [1] : vector<8x32xf32> to vector<8xf32>
    %10 = vector.shape_cast %9 : vector<8xf32> to vector<8x1xf32>
    %cst_5 = arith.constant 1.000000e-24 : f32
    %11 = vector.broadcast %cst_5 : f32 to vector<8x1xf32>
    %12 = arith.maximumf %10, %11 : vector<8x1xf32>
    %13 = math.rsqrt %12 : vector<8x1xf32>
    %cst_6 = arith.constant 14.2857141 : f32
    %14 = vector.broadcast %cst_6 : f32 to vector<8x1xf32>
    %15 = arith.mulf %7, %14 : vector<8x1xf32>
    %16 = vector.broadcast %15 : vector<8x1xf32> to vector<8x32xf32>
    %17 = arith.mulf %0, %16 : vector<8x32xf32>
    %18 = vector.broadcast %13 : vector<8x1xf32> to vector<8x32xf32>
    %19 = arith.mulf %1, %18 : vector<8x32xf32>
    %20 = arith.mulf %17, %19 : vector<8x32xf32>
    %cst_7 = arith.constant dense<0.000000e+00> : vector<8xf32>
    %21 = vector.multi_reduction <add>, %20, %cst_7 [1] : vector<8x32xf32> to vector<8xf32>
    %22 = vector.shape_cast %21 : vector<8xf32> to vector<8x1xf32>
    %c0_8 = arith.constant 0 : index
    %c0_9 = arith.constant 0 : index
    %23 = vector.load %arg4[%c0_8, %c0_9] : memref<8x1xf32, #tpu.memory_space<vmem>>, vector<8x1xf32>
    tpu.vector_store %arg4[%c0_8, %c0_9], %22 {strides = array<i32>} : memref<8x1xf32, #tpu.memory_space<vmem>>, vector<8x1xf32>,
    %c0_10 = arith.constant 0 : index
    %c0_11 = arith.constant 0 : index
    %24 = vector.load %arg3[%c0_10, %c0_11] : memref<8x32xf32, #tpu.memory_space<vmem>>, vector<8x32xf32>
    tpu.vector_store %arg3[%c0_10, %c0_11], %17 {strides = array<i32>} : memref<8x32xf32, #tpu.memory_space<vmem>>, vector<8x32xf32>,
    return
  }
  func.func @transform_0(%arg0: i32) -> (i32, i32) {
    %c0_i32 = arith.constant 0 : i32
    %c0_i32_0 = arith.constant 0 : i32
    return %arg0, %c0_i32 : i32, i32
  }
  func.func @transform_1(%arg0: i32) -> (i32, i32) {
    %c0_i32 = arith.constant 0 : i32
    %c0_i32_0 = arith.constant 0 : i32
    return %arg0, %c0_i32 : i32, i32
  }
  func.func @transform_2(%arg0: i32) -> (i32, i32) {
    %c0_i32 = arith.constant 0 : i32
    %c0_i32_0 = arith.constant 0 : i32
    return %arg0, %c0_i32 : i32, i32
  }
  func.func @transform_3(%arg0: i32) -> (i32, i32) {
    %c0_i32 = arith.constant 0 : i32
    %c0_i32_0 = arith.constant 0 : i32
    return %arg0, %c0_i32 : i32, i32
  }
}

</mosaic_0001>

<llo_original>
// kernel: tpu_custom_call.1
$region0: #{tpu_custom_call.1}
  #allocation0 [shape = 'u32[]', space=smem, size = 0x4, offset = 0x4, fixed_abs, tag = 'smem constant byte address 0x4 - core index']
  #allocation1 [shape = 'u32[72,128]{1,0:T(1,128)}', space=vmem, size = 0x9000, scoped, tag = 'internal scratch']
  %s0 = inlined_call_operand.hbm [shape: f32[8,32], index: 0, kind: input, shape index: {}]
  %s1 = inlined_call_operand.hbm [shape: f32[8,32], index: 1, kind: input, shape index: {}]
  %s2 = inlined_call_operand.hbm [shape: f32[8,32], index: 2, kind: output, shape index: {0}]
  %s3 = inlined_call_operand.vmem [shape: f32[8,1], index: 3, kind: output, shape index: {1}]
  %4 = xla_tuple %s2, %s3
  %s5 = sld [smem:[#allocation0]]
  $region34: #{tpu_custom_call.1} parent=0
    _
  %s7 = ssub.s32 1, %s5
  %s8 = scalar_select 0, %s7, %s5
  $region1: #{tpu_custom_call.1} parent=0
    #allocation2 [shape = 'u8[4096]{0}', space=vmem, size = 0x1000, scoped, tag = 'input window, operand 0, single buffered']
    #allocation3 [shape = 's32[1]{0}', space=sflag, size = 0x4, scoped, tag = 'scoped memory for tpu_custom_call.1']
    #allocation4 [shape = 's32[1]{0}', space=sflag, size = 0x4, scoped, tag = 'scoped memory for tpu_custom_call.1']
    #allocation5 [shape = 'u8[4096]{0}', space=vmem, size = 0x1000, scoped, tag = 'input window, operand 1, single buffered']
    #allocation6 [shape = 's32[1]{0}', space=sflag, size = 0x4, scoped, tag = 'scoped memory for tpu_custom_call.1']
    #allocation7 [shape = 'u8[4096]{0}', space=vmem, size = 0x1000, scoped, tag = 'output window, operand 0, single buffered']
    %9 = vsyncpa [#allocation3], 0
    %10 = vsyncpa [#allocation6], 0
    %11 = vsyncpa [#allocation4], 0
    // Predicated region
    $region2: #{tpu_custom_call.1} parent=1 // pred_check
      _
    $region3: #{tpu_custom_call.1} parent=1 // pred_check_branch
      %13 = sbr.rel (0) target = $region5
    $region4: #{tpu_custom_call.1} parent=1 // pred_region
      %15 = vsyncadd [#allocation3], 0
      %s17 = sshll.u32 %s0, 4
      %s18 = int_to_ptr.hbm [resolvable:$true] %s17
      %s19 = sshll.u32 [#allocation2], 4
      %s20 = int_to_ptr.vmem [resolvable:$true] %s19
      %22 = dma.hbm_to_vmem [thread:$0]  %s18, 128, %s20, [#allocation3]
    $region5: #{tpu_custom_call.1} parent=1 // pred_fallthru
      _
    // Predicated region
    $region6: #{tpu_custom_call.1} parent=1 // pred_check
      _
    $region7: #{tpu_custom_call.1} parent=1 // pred_check_branch
      %24 = sbr.rel (0) target = $region9
    $region8: #{tpu_custom_call.1} parent=1 // pred_region
      %26 = vsyncadd [#allocation6], 0
      %s28 = sshll.u32 %s1, 4
      %s29 = int_to_ptr.hbm [resolvable:$true] %s28
      %s30 = sshll.u32 [#allocation5], 4
      %s31 = int_to_ptr.vmem [resolvable:$true] %s30
      %33 = dma.hbm_to_vmem [thread:$0]  %s29, 128, %s31, [#allocation6]
    $region9: #{tpu_custom_call.1} parent=1 // pred_fallthru
      _
    // Predicated region
    $region10: #{tpu_custom_call.1} parent=1 // pred_check
      _
    $region11: #{tpu_custom_call.1} parent=1 // pred_check_branch
      %35 = sbr.rel (0) target = $region13
    $region12: #{tpu_custom_call.1} parent=1 // pred_region
      %37 = dma.done [#allocation3], 128
    $region13: #{tpu_custom_call.1} parent=1 // pred_fallthru
      _
    // Predicated region
    $region14: #{tpu_custom_call.1} parent=1 // pred_check
      _
    $region15: #{tpu_custom_call.1} parent=1 // pred_check_branch
      %39 = sbr.rel (0) target = $region17
    $region16: #{tpu_custom_call.1} parent=1 // pred_region
      %41 = dma.done [#allocation6], 128
    $region17: #{tpu_custom_call.1} parent=1 // pred_fallthru
      _
    %v42 = vld [vmem:[#allocation2] sm:$0xff]
    %v43 = vld [vmem:[#allocation5] sm:$0xff]
    %v44 = vmul.f32 %v42, %v42
    %vm45 = vcmask 261120
    %v46 = vsel %vm45, %v44, 0.0
    %47 = vadd.xlane.f32.xlu0 %v46
    %v48 = vpop.xlane.xlu0 %47
    %v49 = vmax.f32 %v48, 1e-24
    %v50 = vrsqrt.pop %v49
    %v51 = vmul.f32 %v50, %v49
    %v52 = vmul.f32 %v51, %v50
    %v53 = vmul.f32 0.5, %v52
    %v54 = vsub.f32 1.5, %v53
    %v55 = vmul.f32 %v50, %v54
    %vm56 = vweird.f32 %v49
    %vm57 = vweird.f32 %v50
    %vm58 = vmor %vm56, %vm57
    %v59 = vsel %vm58, %v50, %v55
    %v60 = vmul.f32 %v43, %v43
    %v61 = vsel %vm45, %v60, 0.0
    %62 = vadd.xlane.f32.xlu0 %v61
    %v63 = vpop.xlane.xlu0 %62
    %v64 = vmax.f32 %v63, 1e-24
    %v65 = vrsqrt.pop %v64
    %v66 = vmul.f32 %v65, %v64
    %v67 = vmul.f32 %v66, %v65
    %v68 = vmul.f32 0.5, %v67
    %v69 = vsub.f32 1.5, %v68
    %v70 = vmul.f32 %v65, %v69
    %vm71 = vweird.f32 %v64
    %vm72 = vweird.f32 %v65
    %vm73 = vmor %vm71, %vm72
    %v74 = vsel %vm73, %v65, %v70
    %v75 = vmul.f32 %v59, 14.285714
    %v76 = vmul.f32 %v42, %v75
    %v77 = vmul.f32 %v43, %v74
    %v78 = vmul.f32 %v76, %v77
    %v79 = vsel %vm45, %v78, 0.0
    %80 = vadd.xlane.f32.xlu0 %v79
    %v81 = vpop.xlane.xlu0 %80
    %vm82 = vcmask 7168
    %83 = vst.msk [vmem:[%s3] sm:$0xff] %vm82, %v81
    %84 = vst.msk [vmem:[#allocation7] sm:$0xff] %vm45, %v76
    // Predicated region
    $region18: #{tpu_custom_call.1} parent=1 // pred_check
      _
    $region19: #{tpu_custom_call.1} parent=1 // pred_check_branch
      %86 = sbr.rel (0) target = $region21
    $region20: #{tpu_custom_call.1} parent=1 // pred_region
      %88 = vsyncadd [#allocation4], 0
      %s90 = sshll.u32 [#allocation7], 4
      %s91 = int_to_ptr.vmem [resolvable:$true] %s90
      %s92 = sshll.u32 %s2, 4
      %s93 = int_to_ptr.hbm [resolvable:$true] %s92
      %95 = dma.vmem_to_hbm [thread:$0]  %s91, 128, %s93, [#allocation4]
    $region21: #{tpu_custom_call.1} parent=1 // pred_fallthru
      _
    // Predicated region
    $region22: #{tpu_custom_call.1} parent=1 // pred_check
      _
    $region23: #{tpu_custom_call.1} parent=1 // pred_check_branch
      %97 = sbr.rel (0) target = $region25
    $region24: #{tpu_custom_call.1} parent=1 // pred_region
      _
    $region25: #{tpu_custom_call.1} parent=1 // pred_fallthru
      _
    // Predicated region
    $region26: #{tpu_custom_call.1} parent=1 // pred_check
      _
    $region27: #{tpu_custom_call.1} parent=1 // pred_check_branch
      %99 = sbr.rel (0) target = $region29
    $region28: #{tpu_custom_call.1} parent=1 // pred_region
      %101 = dma.done [#allocation4], 128
    $region29: #{tpu_custom_call.1} parent=1 // pred_fallthru
      _
    // Predicated region
    $region30: #{tpu_custom_call.1} parent=1 // pred_check
      _
    $region31: #{tpu_custom_call.1} parent=1 // pred_check_branch
      %103 = sbr.rel (0) target = $region33
    $region32: #{tpu_custom_call.1} parent=1 // pred_region
      _
    $region33: #{tpu_custom_call.1} parent=1 // pred_fallthru
      _
    %104 = vsyncpa [#allocation3], 1
    %105 = vsyncpa [#allocation6], 1
    %106 = vsyncpa [#allocation4], 1

</llo_original>
